<compile_context>
chip_gen: v7x
topology: tpu7x:2x2x1
jax: 0.10.0
libtpu: 0.0.40
codegen_flags: <defaults>
</compile_context>

<pallas_src>
import functools
import math

import jax
import jax.numpy as jnp
from jax.experimental import pallas as pl
from jax.experimental.pallas import tpu as pltpu

_LN2 = math.log(2.0)


def _js_kernel(p_ref, q_ref, o_ref, *, eps):
    # Cast to f32 BEFORE the eps shift (eps=1e-8 is below bf16 resolution).
    p = p_ref[...].astype(jnp.float32) + eps
    q = q_ref[...].astype(jnp.float32) + eps

    # Renormalize rows: one exact reciprocal per row + cheap VPU multiplies
    # instead of two full [T, V] divides (frees the single EUP slot for logs).
    inv_sp = pl.reciprocal(jnp.sum(p, axis=-1, keepdims=True))
    inv_sq = pl.reciprocal(jnp.sum(q, axis=-1, keepdims=True))
    p = p * inv_sp
    q = q * inv_sq

    # r = p / q via approx reciprocal + one Newton step: one EUP push instead
    # of the multi-op exact-divide sequence; the Newton refinement is VALU work.
    rcp_q = pl.reciprocal(q, approx=True)
    rcp_q = rcp_q * (2.0 - q * rcp_q)        # ~f32 accuracy after one step
    r = p * rcp_q

    # JS identity (2 logs/element instead of 3; no m / log_m temporaries):
    #   KL(p||m) + KL(q||m) = p*log(r) + (p+q)*(ln2 - log(1+r)),  r = p/q
    s = p + q
    t = p * jnp.log(r) + s * (_LN2 - jnp.log(1.0 + r))

    # Single fused reduction over the vocab (lane) axis covers both KL terms.
    o_ref[...] = (0.5 * jnp.sum(t, axis=-1, keepdims=True)).astype(o_ref.dtype)


def _round_up(x, m):
    return ((x + m - 1) // m) * m


def _vmem_limit_bytes():
    # ~75% of physical VMEM: ~96 MiB on v5e/v6e (128 MiB), ~48 MiB on v7x (64 MiB).
    cap = 64 * 1024 * 1024
    try:
        info = pltpu.get_tpu_info()
        cap = int(getattr(info, "vmem_capacity_bytes", cap) or cap)
    except Exception:
        pass
    return int(cap * 3 // 4)


def _pick_row_tile(R, V, in_itemsize, vmem_limit):
    """Largest row tile that fits VMEM while keeping >= 4 grid steps."""
    # Sublane-packing alignment: 8 rows (f32), 16 (bf16), 32 (int8/fp8).
    align = max(8, 32 // max(in_itemsize, 1))
    budget = int(vmem_limit * 0.65)              # headroom for compiler temps
    # Per row: 2 inputs x 2 pipeline buffers + ~6 live f32 [T, V] intermediates
    # (p, q, rcp/r, s, log results, t around the fused expression).
    per_row = 2 * 2 * V * in_itemsize + 6 * V * 4
    t = budget // max(per_row, 1)
    t = min(t, 1024)                             # >1024 rows buys nothing more
    # Keep >= 4 grid steps when R is big enough: DMA/compute overlap on every
    # generation, and the "parallel" axis has work for both v7x TensorCores.
    if R >= 4 * align:
        t = min(t, _round_up(pl.cdiv(R, 4), align))
    if t >= R:
        return R                                 # single block == full row dim
    return max(align, (t // align) * align)      # sublane-pack aligned


def js_divergence(p_probs, q_probs, *, eps=1e-8, row_tile=None):
    """JS divergence per position. p_probs, q_probs: [B, S, V] -> [B, S]."""
    assert eps > 0, "eps must be > 0 (the r = p/q form requires strictly positive q)"
    assert p_probs.shape == q_probs.shape
    B, S, V = p_probs.shape
    R = B * S

    in_itemsize = max(jnp.dtype(p_probs.dtype).itemsize,
                      jnp.dtype(q_probs.dtype).itemsize)
    vmem_limit = _vmem_limit_bytes()
    if row_tile is None:
        row_tile = _pick_row_tile(R, V, in_itemsize, vmem_limit)

    # No input padding: ragged tail rows in the last block are computed on
    # unspecified data and their outputs are simply never used.
    G = pl.cdiv(R, row_tile)

    p2 = p_probs.reshape(R, V)
    q2 = q_probs.reshape(R, V)

    cost = pl.CostEstimate(
        flops=int(12 * R * V),
        transcendentals=int(3 * R * V),
        bytes_accessed=int(2 * R * V * in_itemsize + R * 4),
    )

    out = pl.pallas_call(
        functools.partial(_js_kernel, eps=eps),
        out_shape=jax.ShapeDtypeStruct((R, 1), jnp.float32),
        grid=(G,),
        in_specs=[
            pl.BlockSpec((row_tile, V), lambda i: (i, 0)),
            pl.BlockSpec((row_tile, V), lambda i: (i, 0)),
        ],
        out_specs=pl.BlockSpec((row_tile, 1), lambda i: (i, 0)),
        compiler_params=pltpu.CompilerParams(
            dimension_semantics=("parallel",),   # shards row loop across TCs (v7x)
            vmem_limit_bytes=vmem_limit,
        ),
        cost_estimate=cost,
    )(p2, q2)

    return out.reshape(B, S)


def _js_divergence_ref(p_probs, q_probs, eps=1e-8):
    """Pure-JAX reference mirroring the PyTorch forward (topk=None)."""
    p = p_probs.astype(jnp.float32) + eps
    q = q_probs.astype(jnp.float32) + eps
    p = p / jnp.sum(p, axis=-1, keepdims=True)
    q = q / jnp.sum(q, axis=-1, keepdims=True)
    m = 0.5 * (p + q)
    kl_p_m = jnp.sum(p * (jnp.log(p) - jnp.log(m)), axis=-1)
    kl_q_m = jnp.sum(q * (jnp.log(q) - jnp.log(m)), axis=-1)
    return 0.5 * (kl_p_m + kl_q_m)


if __name__ == "__main__":
    B, S, V = 2, 8, 128  # batch, seq_len, vocab_size

    key = jax.random.PRNGKey(0)
    kp, kq = jax.random.split(key)
    # Proper probability distributions over the vocab axis.
    p_probs = jax.nn.softmax(jax.random.normal(kp, (B, S, V), jnp.float32), axis=-1)
    q_probs = jax.nn.softmax(jax.random.normal(kq, (B, S, V), jnp.float32), axis=-1)

    out = js_divergence(p_probs, q_probs)
    out = jax.block_until_ready(out)

    ref = _js_divergence_ref(p_probs, q_probs)
    assert out.shape == (B, S), out.shape
    err = jnp.max(jnp.abs(out - ref))
    # Tolerance accounts for the 2-log rewrite + approx-reciprocal/Newton divide.
    assert jnp.allclose(out, ref, atol=3e-5, rtol=1e-4), f"max abs err {err}"

    print("KERNEL_OK")
</pallas_src>

<mosaic_0001>
module attributes {stable_mosaic.version = 11 : i64} {
  func.func @_js_kernel(%arg0: i32, %arg1: memref<16x128xf32, #tpu.memory_space<vmem>>, %arg2: memref<16x128xf32, #tpu.memory_space<vmem>>, %arg3: memref<16x1xf32, #tpu.memory_space<vmem>>) attributes {dimension_semantics = [#tpu.dimension_semantics<parallel>], iteration_bounds = array<i64: 1>, scalar_prefetch = 0 : i64, scratch_operands = 0 : i64, tpu.core_type = #tpu.core_type<tc>, window_params = [{transform_indices = @transform_0, window_bounds = array<i64: 16, 128>}, {transform_indices = @transform_1, window_bounds = array<i64: 16, 128>}, {transform_indices = @transform_2, window_bounds = array<i64: 16, 1>}]} {
    %c0 = arith.constant 0 : index
    %c0_0 = arith.constant 0 : index
    %0 = vector.load %arg1[%c0, %c0_0] : memref<16x128xf32, #tpu.memory_space<vmem>>, vector<16x128xf32>
    %cst = arith.constant 9.99999993E-9 : f32
    %1 = vector.broadcast %cst : f32 to vector<16x128xf32>
    %2 = arith.addf %0, %1 : vector<16x128xf32>
    %c0_1 = arith.constant 0 : index
    %c0_2 = arith.constant 0 : index
    %3 = vector.load %arg2[%c0_1, %c0_2] : memref<16x128xf32, #tpu.memory_space<vmem>>, vector<16x128xf32>
    %cst_3 = arith.constant 9.99999993E-9 : f32
    %4 = vector.broadcast %cst_3 : f32 to vector<16x128xf32>
    %5 = arith.addf %3, %4 : vector<16x128xf32>
    %cst_4 = arith.constant dense<0.000000e+00> : vector<16xf32>
    %6 = vector.multi_reduction <add>, %2, %cst_4 [1] : vector<16x128xf32> to vector<16xf32>
    %7 = vector.shape_cast %6 : vector<16xf32> to vector<16x1xf32>
    %8 = tpu.reciprocal %7 : vector<16x1xf32> -> vector<16x1xf32>
    %cst_5 = arith.constant dense<0.000000e+00> : vector<16xf32>
    %9 = vector.multi_reduction <add>, %5, %cst_5 [1] : vector<16x128xf32> to vector<16xf32>
    %10 = vector.shape_cast %9 : vector<16xf32> to vector<16x1xf32>
    %11 = tpu.reciprocal %10 : vector<16x1xf32> -> vector<16x1xf32>
    %12 = vector.broadcast %8 : vector<16x1xf32> to vector<16x128xf32>
    %13 = arith.mulf %2, %12 : vector<16x128xf32>
    %14 = vector.broadcast %11 : vector<16x1xf32> to vector<16x128xf32>
    %15 = arith.mulf %5, %14 : vector<16x128xf32>
    %16 = tpu.reciprocal %15 {approx = true} : vector<16x128xf32> -> vector<16x128xf32>
    %17 = arith.mulf %15, %16 : vector<16x128xf32>
    %cst_6 = arith.constant 2.000000e+00 : f32
    %18 = vector.broadcast %cst_6 : f32 to vector<16x128xf32>
    %19 = arith.subf %18, %17 : vector<16x128xf32>
    %20 = arith.mulf %16, %19 : vector<16x128xf32>
    %21 = arith.mulf %13, %20 : vector<16x128xf32>
    %22 = arith.addf %13, %15 : vector<16x128xf32>
    %23 = math.log %21 : vector<16x128xf32>
    %24 = arith.mulf %13, %23 : vector<16x128xf32>
    %cst_7 = arith.constant 1.000000e+00 : f32
    %25 = vector.broadcast %cst_7 : f32 to vector<16x128xf32>
    %26 = arith.addf %25, %21 : vector<16x128xf32>
    %27 = math.log %26 : vector<16x128xf32>
    %cst_8 = arith.constant 0.693147182 : f32
    %28 = vector.broadcast %cst_8 : f32 to vector<16x128xf32>
    %29 = arith.subf %28, %27 : vector<16x128xf32>
    %30 = arith.mulf %22, %29 : vector<16x128xf32>
    %31 = arith.addf %24, %30 : vector<16x128xf32>
    %cst_9 = arith.constant dense<0.000000e+00> : vector<16xf32>
    %32 = vector.multi_reduction <add>, %31, %cst_9 [1] : vector<16x128xf32> to vector<16xf32>
    %33 = vector.shape_cast %32 : vector<16xf32> to vector<16x1xf32>
    %cst_10 = arith.constant 5.000000e-01 : f32
    %34 = vector.broadcast %cst_10 : f32 to vector<16x1xf32>
    %35 = arith.mulf %34, %33 : vector<16x1xf32>
    %c0_11 = arith.constant 0 : index
    %c0_12 = arith.constant 0 : index
    %36 = vector.load %arg3[%c0_11, %c0_12] : memref<16x1xf32, #tpu.memory_space<vmem>>, vector<16x1xf32>
    tpu.vector_store %arg3[%c0_11, %c0_12], %35 {strides = array<i32>} : memref<16x1xf32, #tpu.memory_space<vmem>>, vector<16x1xf32>,
    return
  }
  func.func @transform_0(%arg0: i32) -> (i32, i32) {
    %c0_i32 = arith.constant 0 : i32
    %c0_i32_0 = arith.constant 0 : i32
    return %arg0, %c0_i32 : i32, i32
  }
  func.func @transform_1(%arg0: i32) -> (i32, i32) {
    %c0_i32 = arith.constant 0 : i32
    %c0_i32_0 = arith.constant 0 : i32
    return %arg0, %c0_i32 : i32, i32
  }
  func.func @transform_2(%arg0: i32) -> (i32, i32) {
    %c0_i32 = arith.constant 0 : i32
    %c0_i32_0 = arith.constant 0 : i32
    return %arg0, %c0_i32 : i32, i32
  }
}

</mosaic_0001>

<llo_original>
// kernel: tpu_custom_call.1
$region0: #{tpu_custom_call.1}
  #allocation0 [shape = 'u32[]', space=smem, size = 0x4, offset = 0x4, fixed_abs, tag = 'smem constant byte address 0x4 - core index']
  #allocation1 [shape = 'u32[144,128]{1,0:T(1,128)}', space=vmem, size = 0x12000, scoped, tag = 'internal scratch']
  %s0 = inlined_call_operand.hbm [shape: f32[16,128], index: 0, kind: input, shape index: {}]
  %s1 = inlined_call_operand.hbm [shape: f32[16,128], index: 1, kind: input, shape index: {}]
  %s2 = inlined_call_operand.vmem [shape: f32[16,1], index: 2, kind: output, shape index: {}]
  %s3 = sld [smem:[#allocation0]]
  $region26: #{tpu_custom_call.1} parent=0
    _
  %s5 = ssub.s32 1, %s3
  %s6 = scalar_select 0, %s5, %s3
  $region1: #{tpu_custom_call.1} parent=0
    #allocation2 [shape = 'u8[8192]{0}', space=vmem, size = 0x2000, scoped, tag = 'input window, operand 0, single buffered']
    #allocation3 [shape = 's32[1]{0}', space=sflag, size = 0x4, scoped, tag = 'scoped memory for tpu_custom_call.1']
    #allocation4 [shape = 'u8[8192]{0}', space=vmem, size = 0x2000, scoped, tag = 'input window, operand 1, single buffered']
    #allocation5 [shape = 's32[1]{0}', space=sflag, size = 0x4, scoped, tag = 'scoped memory for tpu_custom_call.1']
    %7 = vsyncpa [#allocation3], 0
    %8 = vsyncpa [#allocation5], 0
    // Predicated region
    $region2: #{tpu_custom_call.1} parent=1 // pred_check
      _
    $region3: #{tpu_custom_call.1} parent=1 // pred_check_branch
      %10 = sbr.rel (0) target = $region5
    $region4: #{tpu_custom_call.1} parent=1 // pred_region
      %s12 = ssub.s32 256, 256
      %13 = vsyncadd [#allocation3], %s12
      %s14 = sshll.u32 [#allocation2], 4
      %s15 = int_to_ptr.vmem [resolvable:$true] %s14
      %20 = dma.hbm_to_vmem [thread:$0]  %s0, 256, %s15, [#allocation3], 128, 128, 8
    $region5: #{tpu_custom_call.1} parent=1 // pred_fallthru
      _
    // Predicated region
    $region6: #{tpu_custom_call.1} parent=1 // pred_check
      _
    $region7: #{tpu_custom_call.1} parent=1 // pred_check_branch
      %22 = sbr.rel (0) target = $region9
    $region8: #{tpu_custom_call.1} parent=1 // pred_region
      %s24 = ssub.s32 256, 256
      %25 = vsyncadd [#allocation5], %s24
      %s26 = sshll.u32 [#allocation4], 4
      %s27 = int_to_ptr.vmem [resolvable:$true] %s26
      %32 = dma.hbm_to_vmem [thread:$0]  %s1, 256, %s27, [#allocation5], 128, 128, 8
    $region9: #{tpu_custom_call.1} parent=1 // pred_fallthru
      _
    // Predicated region
    $region10: #{tpu_custom_call.1} parent=1 // pred_check
      _
    $region11: #{tpu_custom_call.1} parent=1 // pred_check_branch
      %34 = sbr.rel (0) target = $region13
    $region12: #{tpu_custom_call.1} parent=1 // pred_region
      %35 = dma.done [#allocation3], 256
    $region13: #{tpu_custom_call.1} parent=1 // pred_fallthru
      _
    // Predicated region
    $region14: #{tpu_custom_call.1} parent=1 // pred_check
      _
    $region15: #{tpu_custom_call.1} parent=1 // pred_check_branch
      %37 = sbr.rel (0) target = $region17
    $region16: #{tpu_custom_call.1} parent=1 // pred_region
      %38 = dma.done [#allocation5], 256
    $region17: #{tpu_custom_call.1} parent=1 // pred_fallthru
      _
    %v39 = vld [vmem:[#allocation2] sm:$0xff]
    %v40 = vld [vmem:[#allocation2 + $0x8] sm:$0xff]
    %v41 = vadd.f32 %v39, 1e-08
    %v42 = vadd.f32 %v40, 1e-08
    %v43 = vld [vmem:[#allocation4] sm:$0xff]
    %v44 = vld [vmem:[#allocation4 + $0x8] sm:$0xff]
    %v45 = vadd.f32 %v43, 1e-08
    %v46 = vadd.f32 %v44, 1e-08
    %47 = vadd.xlane.f32.xlu0 %v41
    %v48 = vpop.xlane.xlu0 %47
    %49 = vadd.xlane.f32.xlu0 %v42
    %v50 = vpop.xlane.xlu0 %49
    %v51 = vrcp.pop %v48
    %v52 = vrcp.pop %v50
    %53 = vadd.xlane.f32.xlu0 %v45
    %v54 = vpop.xlane.xlu0 %53
    %55 = vadd.xlane.f32.xlu0 %v46
    %v56 = vpop.xlane.xlu0 %55
    %v57 = vrcp.pop %v54
    %v58 = vrcp.pop %v56
    %v59 = vmul.f32 %v41, %v51
    %v60 = vmul.f32 %v42, %v52
    %v61 = vmul.f32 %v45, %v57
    %v62 = vmul.f32 %v46, %v58
    %v63 = vrcp.pop %v61
    %v64 = vrcp.pop %v62
    %v65 = vmul.f32 %v61, %v63
    %v66 = vmul.f32 %v62, %v64
    %v67 = vsub.f32 2.0, %v65
    %v68 = vsub.f32 2.0, %v66
    %v69 = vmul.f32 %v63, %v67
    %v70 = vmul.f32 %v64, %v68
    %v71 = vmul.f32 %v59, %v69
    %v72 = vmul.f32 %v60, %v70
    %v73 = vadd.f32 %v59, %v61
    %v74 = vadd.f32 %v60, %v62
    %v75 = vlog2.pop %v71
    %v76 = vmul.f32 %v75, 0.6931472
    %v77 = vlog2.pop %v72
    %v78 = vmul.f32 %v77, 0.6931472
    %v79 = vmul.f32 %v59, %v76
    %v80 = vmul.f32 %v60, %v78
    %v81 = vadd.f32 %v71, 1.0
    %v82 = vadd.f32 %v72, 1.0
    %v83 = vlog2.pop %v81
    %v84 = vmul.f32 %v83, 0.6931472
    %v85 = vlog2.pop %v82
    %v86 = vmul.f32 %v85, 0.6931472
    %v87 = vsub.f32 0.6931472, %v84
    %v88 = vsub.f32 0.6931472, %v86
    %v89 = vmul.f32 %v73, %v87
    %v90 = vmul.f32 %v74, %v88
    %v91 = vadd.f32 %v79, %v89
    %v92 = vadd.f32 %v80, %v90
    %93 = vadd.xlane.f32.xlu0 %v91
    %v94 = vpop.xlane.xlu0 %93
    %95 = vadd.xlane.f32.xlu0 %v92
    %v96 = vpop.xlane.xlu0 %95
    %v97 = vmul.f32 %v94, 0.5
    %v98 = vmul.f32 %v96, 0.5
    %vm99 = vcmask 7168
    %100 = vst.msk [vmem:[%s2] sm:$0xff] %vm99, %v97
    %101 = vst.msk [vmem:[%s2 + $0x8] sm:$0xff] %vm99, %v98
    // Predicated region
    $region18: #{tpu_custom_call.1} parent=1 // pred_check
      _
    $region19: #{tpu_custom_call.1} parent=1 // pred_check_branch
      %103 = sbr.rel (0) target = $region21
    $region20: #{tpu_custom_call.1} parent=1 // pred_region
      _
    $region21: #{tpu_custom_call.1} parent=1 // pred_fallthru
      _
    // Predicated region
    $region22: #{tpu_custom_call.1} parent=1 // pred_check
      _
    $region23: #{tpu_custom_call.1} parent=1 // pred_check_branch
      %105 = sbr.rel (0) target = $region25
    $region24: #{tpu_custom_call.1} parent=1 // pred_region
      _
    $region25: #{tpu_custom_call.1} parent=1 // pred_fallthru
      _
    %106 = vsyncpa [#allocation3], 1
    %107 = vsyncpa [#allocation5], 1

</llo_original>
